<compile_context>
chip_gen: v7x
topology: tpu7x:2x2x1
jax: 0.10.0
libtpu: 0.0.40
codegen_flags: <defaults>
</compile_context>

<pallas_src>
import jax
import jax.numpy as jnp
from jax.experimental import pallas as pl
from jax.experimental.pallas import tpu as pltpu

LANE = 128        # TPU lane width (last dim)
DEFAULT_TB = 128  # batch tile (M rows fed to the MXU); multiple of 8 (f32) and 16 (bf16)


def _round_up(n, m):
    return ((n + m - 1) // m) * m


def phi_system_kernel(x_ref, m1_ref, b1_ref, w2t_ref, b2_ref, o_ref):
    """Fused PhiSystem forward on one (TB, Dp) batch tile.

      x_ref  : (TB, Dp)  state tile (f32)
      m1_ref : (Dp, Hp)  (W1 @ A)^T   -- base system folded into Linear #1 (compute dtype)
      b1_ref : (1,  Hp)  bA @ W1^T + b1 (f32)
      w2t_ref: (Hp, Dp)  W2^T           (compute dtype)
      b2_ref : (1,  Dp)  b2             (f32)
      o_ref  : (TB, Dp)  output tile

    Weights are contraction-ready (K, N): no in-kernel transposes.  Matmuls run in the
    weights' compute dtype (bf16 by default) with f32 accumulation; bias add and tanh
    stay in f32.
    """
    x = x_ref[...].astype(m1_ref.dtype)

    h_pre = jnp.dot(x, m1_ref[...], preferred_element_type=jnp.float32) + b1_ref[...]
    h = jnp.tanh(h_pre).astype(w2t_ref.dtype)
    out = jnp.dot(h, w2t_ref[...], preferred_element_type=jnp.float32) + b2_ref[...]

    o_ref[...] = out.astype(o_ref.dtype)


def prepare_params(params, compute_dtype=jnp.bfloat16):
    """Fold base system into Linear #1, pre-transpose, and lane-pad ONCE (outside kernel).

    Zero feature-padding is exact: padded M1 rows/cols are zero, tanh(0)=0, padded W2^T
    rows are zero, padded biases are zero, so padded output columns stay 0 and real
    columns are untouched.  (Padded *batch* rows are not zero after the bias add, but
    they are sliced away in the wrapper.)
    """
    A, bA, W1, b1, W2, b2 = [jnp.asarray(p, jnp.float32) for p in params]
    D = A.shape[0]
    H = W1.shape[0]
    Dp = _round_up(max(D, LANE), LANE)
    Hp = _round_up(max(H, LANE), LANE)

    # dxdt = x @ A^T + bA ; h_pre = dxdt @ W1^T + b1
    #      = x @ (W1 @ A)^T + (bA @ W1^T + b1)      -> one fewer MXU pass per tile.
    M1 = (W1 @ A).T            # (D, H) contraction-ready
    b1_fused = bA @ W1.T + b1  # (1, H)

    def pad(m, rows, cols, dtype):
        buf = jnp.zeros((rows, cols), dtype)
        return buf.at[: m.shape[0], : m.shape[1]].set(m.astype(dtype))

    M1p = pad(M1, Dp, Hp, compute_dtype)       # (Dp, Hp)
    W2tp = pad(W2.T, Hp, Dp, compute_dtype)    # (Hp, Dp)
    b1p = pad(b1_fused, 1, Hp, jnp.float32)    # (1, Hp)  keep biases f32
    b2p = pad(b2, 1, Dp, jnp.float32)          # (1, Dp)
    return (M1p, b1p, W2tp, b2p), (D, H, Dp, Hp)


def _build_phi_call(Bp, Dp, Hp, tb, out_dtype, single_buffer_weights):
    grid = (Bp // tb,)
    act_spec = pl.BlockSpec((tb, Dp), lambda i: (i, 0))  # pipelined activation tiles

    def resident(shape):
        # Constant index_map -> block never changes across grid steps (VMEM-resident).
        if single_buffer_weights:
            return pl.BlockSpec(shape, lambda i: (0, 0), pipeline_mode=pl.Buffered(1))
        return pl.BlockSpec(shape, lambda i: (0, 0))

    return pl.pallas_call(
        phi_system_kernel,
        out_shape=jax.ShapeDtypeStruct((Bp, Dp), out_dtype),
        grid=grid,
        in_specs=[
            act_spec,                 # x tile
            resident((Dp, Hp)),       # (W1 @ A)^T
            resident((1, Hp)),        # fused bias 1
            resident((Hp, Dp)),       # W2^T
            resident((1, Dp)),        # b2
        ],
        out_specs=act_spec,
        compiler_params=pltpu.CompilerParams(
            dimension_semantics=("parallel",),     # lets v7x shard batch tiles over 2 TCs
            vmem_limit_bytes=48 * 1024 * 1024,     # above v5e's 16 MiB default, below v7x's 64 MiB
        ),
    )


def phi_system_forward(t, x, padded_params, dims, tb=DEFAULT_TB):
    """JAX wrapper. `t` kept for API parity (autonomous base system -> unused)."""
    del t
    squeezed_in = x.ndim == 1
    if squeezed_in:
        x = x[None, :]

    B, D = x.shape
    M1p, b1p, W2tp, b2p = padded_params
    D0, H0, Dp, Hp = dims
    assert D == D0, "state dim must match prepared params"

    Bp = _round_up(max(B, tb), tb)
    # TODO(synk): in a hot loop keep x in the padded (Bp, Dp) layout across calls; this
    # per-call pad is an extra HBM round-trip of an inflated buffer.
    xp = jnp.zeros((Bp, Dp), x.dtype).at[:B, :D].set(x)

    try:
        out_p = _build_phi_call(Bp, Dp, Hp, tb, x.dtype, True)(xp, M1p, b1p, W2tp, b2p)
        out_p = jax.block_until_ready(out_p)
    except Exception:
        # pl.Buffered(1) not supported on this jax/libtpu combo -> default 2-deep pipeline.
        out_p = _build_phi_call(Bp, Dp, Hp, tb, x.dtype, False)(xp, M1p, b1p, W2tp, b2p)

    out = out_p[:B, :D]
    # mirror `dx_dt_transformed.squeeze(0)`: only collapses a leading batch of 1
    if squeezed_in or B == 1:
        out = out[0]
    return out


def init_params(key, dim, hidden, dtype=jnp.float32):
    kA, kbA, kW1, kb1, kW2, kb2 = jax.random.split(key, 6)
    A = jax.random.normal(kA, (dim, dim), dtype) * 0.5
    bA = jax.random.normal(kbA, (1, dim), dtype) * 0.1
    W1 = jax.random.normal(kW1, (hidden, dim), dtype) * (1.0 / jnp.sqrt(dim))
    b1 = jax.random.normal(kb1, (1, hidden), dtype) * 0.1
    W2 = jax.random.normal(kW2, (dim, hidden), dtype) * (1.0 / jnp.sqrt(hidden))
    b2 = jax.random.normal(kb2, (1, dim), dtype) * 0.1
    return A, bA, W1, b1, W2, b2


def phi_system_reference(t, x, params):
    """Pure-JAX reference (PyTorch nn.Linear convention: y = x @ W^T + b)."""
    if x.ndim == 1:
        x = x[None, :]
    A, bA, W1, b1, W2, b2 = params
    dxdt = x @ A.T + bA
    h = jnp.tanh(dxdt @ W1.T + b1)
    out = h @ W2.T + b2
    return out[0] if out.shape[0] == 1 else out


if __name__ == "__main__":
    key = jax.random.PRNGKey(0)
    k_params, k_x = jax.random.split(key)

    batch, dim, hidden = 8, 4, 32
    params = init_params(k_params, dim, hidden)
    x = jax.random.normal(k_x, (batch, dim), jnp.float32)
    t = jnp.float32(0.0)  # unused by the autonomous base system

    ref = phi_system_reference(t, x, params)

    # f32 compute path: tight check of the fused-kernel math against the reference.
    pp_f32, dims = prepare_params(params, compute_dtype=jnp.float32)
    out_f32 = jax.block_until_ready(phi_system_forward(t, x, pp_f32, dims))
    assert out_f32.shape == (batch, dim)
    assert jnp.allclose(out_f32, ref, atol=1e-5, rtol=1e-5), (
        f"f32 max abs err {jnp.max(jnp.abs(out_f32 - ref))}"
    )

    # bf16 MXU path (production config): expected small rounding shift -> looser tolerance.
    pp_bf16, dims_bf16 = prepare_params(params, compute_dtype=jnp.bfloat16)
    out_bf16 = jax.block_until_ready(phi_system_forward(t, x, pp_bf16, dims_bf16))
    assert out_bf16.shape == (batch, dim)
    assert jnp.allclose(out_bf16, ref, atol=5e-2, rtol=5e-2), (
        f"bf16 max abs err {jnp.max(jnp.abs(out_bf16 - ref))}"
    )

    # also exercise the 1-D (unsqueeze/squeeze) path of the PyTorch forward
    out1 = jax.block_until_ready(phi_system_forward(t, x[0], pp_f32, dims))
    ref1 = phi_system_reference(t, x[0], params)
    assert out1.shape == (dim,)
    assert jnp.allclose(out1, ref1, atol=1e-5, rtol=1e-5)

    print("KERNEL_OK")
</pallas_src>

<mosaic_0001>
module attributes {stable_mosaic.version = 11 : i64} {
  func.func @phi_system_kernel(%arg0: i32, %arg1: memref<128x128xf32, #tpu.memory_space<vmem>>, %arg2: memref<128x128xf32, #tpu.memory_space<vmem>>, %arg3: memref<1x128xf32, #tpu.memory_space<vmem>>, %arg4: memref<128x128xf32, #tpu.memory_space<vmem>>, %arg5: memref<1x128xf32, #tpu.memory_space<vmem>>, %arg6: memref<128x128xf32, #tpu.memory_space<vmem>>) attributes {dimension_semantics = [#tpu.dimension_semantics<parallel>], iteration_bounds = array<i64: 1>, scalar_prefetch = 0 : i64, scratch_operands = 0 : i64, tpu.core_type = #tpu.core_type<tc>, window_params = [{transform_indices = @transform_0, window_bounds = array<i64: 128, 128>}, {pipeline_mode = #tpu.pipeline_mode<synchronous>, transform_indices = @transform_1, window_bounds = array<i64: 128, 128>}, {pipeline_mode = #tpu.pipeline_mode<synchronous>, transform_indices = @transform_2, window_bounds = array<i64: 1, 128>}, {pipeline_mode = #tpu.pipeline_mode<synchronous>, transform_indices = @transform_3, window_bounds = array<i64: 128, 128>}, {pipeline_mode = #tpu.pipeline_mode<synchronous>, transform_indices = @transform_4, window_bounds = array<i64: 1, 128>}, {transform_indices = @transform_5, window_bounds = array<i64: 128, 128>}]} {
    %c0 = arith.constant 0 : index
    %c0_0 = arith.constant 0 : index
    %0 = vector.load %arg1[%c0, %c0_0] : memref<128x128xf32, #tpu.memory_space<vmem>>, vector<128x128xf32>
    %c0_1 = arith.constant 0 : index
    %c0_2 = arith.constant 0 : index
    %1 = vector.load %arg2[%c0_1, %c0_2] : memref<128x128xf32, #tpu.memory_space<vmem>>, vector<128x128xf32>
    %cst = arith.constant dense<0.000000e+00> : vector<128x128xf32>
    %2 = tpu.matmul %0, %1, %cst {dimension_numbers = #tpu.dot_dimension_numbers<[1], [0], [0], [1], [0, 0, 1, 1], [], []>} : vector<128x128xf32>, vector<128x128xf32>, vector<128x128xf32> -> vector<128x128xf32>
    %c0_3 = arith.constant 0 : index
    %c0_4 = arith.constant 0 : index
    %3 = vector.load %arg3[%c0_3, %c0_4] : memref<1x128xf32, #tpu.memory_space<vmem>>, vector<1x128xf32>
    %4 = vector.broadcast %3 : vector<1x128xf32> to vector<128x128xf32>
    %5 = arith.addf %2, %4 : vector<128x128xf32>
    %6 = math.tanh %5 : vector<128x128xf32>
    %c0_5 = arith.constant 0 : index
    %c0_6 = arith.constant 0 : index
    %7 = vector.load %arg4[%c0_5, %c0_6] : memref<128x128xf32, #tpu.memory_space<vmem>>, vector<128x128xf32>
    %cst_7 = arith.constant dense<0.000000e+00> : vector<128x128xf32>
    %8 = tpu.matmul %6, %7, %cst_7 {dimension_numbers = #tpu.dot_dimension_numbers<[1], [0], [0], [1], [0, 0, 1, 1], [], []>} : vector<128x128xf32>, vector<128x128xf32>, vector<128x128xf32> -> vector<128x128xf32>
    %c0_8 = arith.constant 0 : index
    %c0_9 = arith.constant 0 : index
    %9 = vector.load %arg5[%c0_8, %c0_9] : memref<1x128xf32, #tpu.memory_space<vmem>>, vector<1x128xf32>
    %10 = vector.broadcast %9 : vector<1x128xf32> to vector<128x128xf32>
    %11 = arith.addf %8, %10 : vector<128x128xf32>
    %c0_10 = arith.constant 0 : index
    %c0_11 = arith.constant 0 : index
    %12 = vector.load %arg6[%c0_10, %c0_11] : memref<128x128xf32, #tpu.memory_space<vmem>>, vector<128x128xf32>
    tpu.vector_store %arg6[%c0_10, %c0_11], %11 {strides = array<i32>} : memref<128x128xf32, #tpu.memory_space<vmem>>, vector<128x128xf32>,
    return
  }
  func.func @transform_0(%arg0: i32) -> (i32, i32) {
    %c0_i32 = arith.constant 0 : i32
    %c0_i32_0 = arith.constant 0 : i32
    return %arg0, %c0_i32 : i32, i32
  }
  func.func @transform_1(%arg0: i32) -> (i32, i32) {
    %c0_i32 = arith.constant 0 : i32
    %c0_i32_0 = arith.constant 0 : i32
    %c0_i32_1 = arith.constant 0 : i32
    return %c0_i32, %c0_i32_0 : i32, i32
  }
  func.func @transform_2(%arg0: i32) -> (i32, i32) {
    %c0_i32 = arith.constant 0 : i32
    %c0_i32_0 = arith.constant 0 : i32
    %c0_i32_1 = arith.constant 0 : i32
    return %c0_i32, %c0_i32_0 : i32, i32
  }
  func.func @transform_3(%arg0: i32) -> (i32, i32) {
    %c0_i32 = arith.constant 0 : i32
    %c0_i32_0 = arith.constant 0 : i32
    %c0_i32_1 = arith.constant 0 : i32
    return %c0_i32, %c0_i32_0 : i32, i32
  }
  func.func @transform_4(%arg0: i32) -> (i32, i32) {
    %c0_i32 = arith.constant 0 : i32
    %c0_i32_0 = arith.constant 0 : i32
    %c0_i32_1 = arith.constant 0 : i32
    return %c0_i32, %c0_i32_0 : i32, i32
  }
  func.func @transform_5(%arg0: i32) -> (i32, i32) {
    %c0_i32 = arith.constant 0 : i32
    %c0_i32_0 = arith.constant 0 : i32
    return %arg0, %c0_i32 : i32, i32
  }
}

module attributes {stable_mosaic.version = 11 : i64} {
  func.func @phi_system_kernel(%arg0: i32, %arg1: memref<128x128xf32, #tpu.memory_space<vmem>>, %arg2: memref<128x128xf32, #tpu.memory_space<vmem>>, %arg3: memref<1x128xf32, #tpu.memory_space<vmem>>, %arg4: memref<128x128xf32, #tpu.memory_space<vmem>>, %arg5: memref<1x128xf32, #tpu.memory_space<vmem>>, %arg6: memref<128x128xf32, #tpu.memory_space<vmem>>) attributes {dimension_semantics = [#tpu.dimension_semantics<parallel>], iteration_bounds = array<i64: 1>, scalar_prefetch = 0 : i64, scratch_operands = 0 : i64, tpu.core_type = #tpu.core_type<tc>, window_params = [{transform_indices = @transform_0, window_bounds = array<i64: 128, 128>}, {pipeline_mode = #tpu.pipeline_mode<synchronous>, transform_indices = @transform_1, window_bounds = array<i64: 128, 128>}, {pipeline_mode = #tpu.pipeline_mode<synchronous>, transform_indices = @transform_2, window_bounds = array<i64: 1, 128>}, {pipeline_mode = #tpu.pipeline_mode<synchronous>, transform_indices = @transform_3, window_bounds = array<i64: 128, 128>}, {pipeline_mode = #tpu.pipeline_mode<synchronous>, transform_indices = @transform_4, window_bounds = array<i64: 1, 128>}, {transform_indices = @transform_5, window_bounds = array<i64: 128, 128>}]} {
    %c0 = arith.constant 0 : index
    %c0_0 = arith.constant 0 : index
    %0 = vector.load %arg1[%c0, %c0_0] : memref<128x128xf32, #tpu.memory_space<vmem>>, vector<128x128xf32>
    %c0_1 = arith.constant 0 : index
    %c0_2 = arith.constant 0 : index
    %1 = vector.load %arg2[%c0_1, %c0_2] : memref<128x128xf32, #tpu.memory_space<vmem>>, vector<128x128xf32>
    %cst = arith.constant dense<0.000000e+00> : vector<128x128xf32>
    %2 = tpu.matmul %0, %1, %cst {dimension_numbers = #tpu.dot_dimension_numbers<[1], [0], [0], [1], [0, 0, 1, 1], [], []>} : vector<128x128xf32>, vector<128x128xf32>, vector<128x128xf32> -> vector<128x128xf32>
    %c0_3 = arith.constant 0 : index
    %c0_4 = arith.constant 0 : index
    %3 = vector.load %arg3[%c0_3, %c0_4] : memref<1x128xf32, #tpu.memory_space<vmem>>, vector<1x128xf32>
    %4 = vector.broadcast %3 : vector<1x128xf32> to vector<128x128xf32>
    %5 = arith.addf %2, %4 : vector<128x128xf32>
    %6 = math.tanh %5 : vector<128x128xf32>
    %c0_5 = arith.constant 0 : index
    %c0_6 = arith.constant 0 : index
    %7 = vector.load %arg4[%c0_5, %c0_6] : memref<128x128xf32, #tpu.memory_space<vmem>>, vector<128x128xf32>
    %cst_7 = arith.constant dense<0.000000e+00> : vector<128x128xf32>
    %8 = tpu.matmul %6, %7, %cst_7 {dimension_numbers = #tpu.dot_dimension_numbers<[1], [0], [0], [1], [0, 0, 1, 1], [], []>} : vector<128x128xf32>, vector<128x128xf32>, vector<128x128xf32> -> vector<128x128xf32>
    %c0_8 = arith.constant 0 : index
    %c0_9 = arith.constant 0 : index
    %9 = vector.load %arg5[%c0_8, %c0_9] : memref<1x128xf32, #tpu.memory_space<vmem>>, vector<1x128xf32>
    %10 = vector.broadcast %9 : vector<1x128xf32> to vector<128x128xf32>
    %11 = arith.addf %8, %10 : vector<128x128xf32>
    %c0_10 = arith.constant 0 : index
    %c0_11 = arith.constant 0 : index
    %12 = vector.load %arg6[%c0_10, %c0_11] : memref<128x128xf32, #tpu.memory_space<vmem>>, vector<128x128xf32>
    tpu.vector_store %arg6[%c0_10, %c0_11], %11 {strides = array<i32>} : memref<128x128xf32, #tpu.memory_space<vmem>>, vector<128x128xf32>,
    return
  }
  func.func @transform_0(%arg0: i32) -> (i32, i32) {
    %c0_i32 = arith.constant 0 : i32
    %c0_i32_0 = arith.constant 0 : i32
    return %arg0, %c0_i32 : i32, i32
  }
  func.func @transform_1(%arg0: i32) -> (i32, i32) {
    %c0_i32 = arith.constant 0 : i32
    %c0_i32_0 = arith.constant 0 : i32
    %c0_i32_1 = arith.constant 0 : i32
    return %c0_i32, %c0_i32_0 : i32, i32
  }
  func.func @transform_2(%arg0: i32) -> (i32, i32) {
    %c0_i32 = arith.constant 0 : i32
    %c0_i32_0 = arith.constant 0 : i32
    %c0_i32_1 = arith.constant 0 : i32
    return %c0_i32, %c0_i32_0 : i32, i32
  }
  func.func @transform_3(%arg0: i32) -> (i32, i32) {
    %c0_i32 = arith.constant 0 : i32
    %c0_i32_0 = arith.constant 0 : i32
    %c0_i32_1 = arith.constant 0 : i32
    return %c0_i32, %c0_i32_0 : i32, i32
  }
  func.func @transform_4(%arg0: i32) -> (i32, i32) {
    %c0_i32 = arith.constant 0 : i32
    %c0_i32_0 = arith.constant 0 : i32
    %c0_i32_1 = arith.constant 0 : i32
    return %c0_i32, %c0_i32_0 : i32, i32
  }
  func.func @transform_5(%arg0: i32) -> (i32, i32) {
    %c0_i32 = arith.constant 0 : i32
    %c0_i32_0 = arith.constant 0 : i32
    return %arg0, %c0_i32 : i32, i32
  }
}

</mosaic_0001>

<llo_original>
// kernel: tpu_custom_call.1
$region0: #{tpu_custom_call.1}
  #allocation0 [shape = 'u32[]', space=smem, size = 0x4, offset = 0x4, fixed_abs, tag = 'smem constant byte address 0x4 - core index']
  #allocation1 [shape = 'u32[144,128]{1,0:T(1,128)}', space=vmem, size = 0x12000, scoped, tag = 'internal scratch']
  %s0 = inlined_call_operand.hbm [shape: f32[128,128], index: 0, kind: input, shape index: {}]
  %s1 = inlined_call_operand.hbm [shape: f32[128,128], index: 1, kind: input, shape index: {}]
  %s2 = inlined_call_operand.vmem [shape: f32[1,128], index: 2, kind: input, shape index: {}]
  %s3 = inlined_call_operand.hbm [shape: f32[128,128], index: 3, kind: input, shape index: {}]
  %s4 = inlined_call_operand.vmem [shape: f32[1,128], index: 4, kind: input, shape index: {}]
  %s5 = inlined_call_operand.hbm [shape: f32[128,128], index: 5, kind: output, shape index: {}]
  %s6 = sld [smem:[#allocation0]]
  $region42: #{tpu_custom_call.1} parent=0
    _
  %s8 = ssub.s32 1, %s6
  %s9 = scalar_select 0, %s8, %s6
  $region1: #{tpu_custom_call.1} parent=0
    #allocation2 [shape = 'u8[65536]{0}', space=vmem, size = 0x10000, scoped, tag = 'input window, operand 0, single buffered']
    #allocation3 [shape = 's32[1]{0}', space=sflag, size = 0x4, scoped, tag = 'scoped memory for tpu_custom_call.1']
    #allocation4 [shape = 's32[1]{0}', space=sflag, size = 0x4, scoped, tag = 'scoped memory for tpu_custom_call.1']
    #allocation5 [shape = 'u8[65536]{0}', space=vmem, size = 0x10000, scoped, tag = 'input window, operand 1, single buffered']
    #allocation6 [shape = 's32[1]{0}', space=sflag, size = 0x4, scoped, tag = 'scoped memory for tpu_custom_call.1']
    #allocation7 [shape = 'u8[65536]{0}', space=vmem, size = 0x10000, scoped, tag = 'input window, operand 3, single buffered']
    #allocation8 [shape = 'u8[65536]{0}', space=vmem, size = 0x10000, scoped, tag = 'output window, operand 0, single buffered']
    %10 = vsyncpa [#allocation3], 0
    %11 = vsyncpa [#allocation6], 0
    %12 = vsyncpa [#allocation4], 0
    // Predicated region
    $region2: #{tpu_custom_call.1} parent=1 // pred_check
      _
    $region3: #{tpu_custom_call.1} parent=1 // pred_check_branch
      %14 = sbr.rel (0) target = $region5
    $region4: #{tpu_custom_call.1} parent=1 // pred_region
      %s16 = ssub.s32 2048, 2048
      %17 = vsyncadd [#allocation3], %s16
      %s18 = sshll.u32 [#allocation2], 4
      %s19 = int_to_ptr.vmem [resolvable:$true] %s18
      %24 = dma.hbm_to_vmem [thread:$0]  %s0, 2048, %s19, [#allocation3], 128, 128, 8
    $region5: #{tpu_custom_call.1} parent=1 // pred_fallthru
      _
    // Predicated region
    $region6: #{tpu_custom_call.1} parent=1 // pred_check
      _
    $region7: #{tpu_custom_call.1} parent=1 // pred_check_branch
      %26 = sbr.rel (0) target = $region9
    $region8: #{tpu_custom_call.1} parent=1 // pred_region
      %s28 = ssub.s32 2048, 2048
      %29 = vsyncadd [#allocation6], %s28
      %s30 = sshll.u32 [#allocation5], 4
      %s31 = int_to_ptr.vmem [resolvable:$true] %s30
      %36 = dma.hbm_to_vmem [thread:$0]  %s1, 2048, %s31, [#allocation6], 128, 128, 8
    $region9: #{tpu_custom_call.1} parent=1 // pred_fallthru
      _
    // Predicated region
    $region10: #{tpu_custom_call.1} parent=1 // pred_check
      _
    $region11: #{tpu_custom_call.1} parent=1 // pred_check_branch
      %38 = sbr.rel (0) target = $region13
    $region12: #{tpu_custom_call.1} parent=1 // pred_region
      _
    $region13: #{tpu_custom_call.1} parent=1 // pred_fallthru
      _
    // Predicated region
    $region14: #{tpu_custom_call.1} parent=1 // pred_check
      _
    $region15: #{tpu_custom_call.1} parent=1 // pred_check_branch
      %40 = sbr.rel (0) target = $region17
    $region16: #{tpu_custom_call.1} parent=1 // pred_region
      %s42 = ssub.s32 2048, 2048
      %43 = vsyncadd [#allocation6], %s42
      %s44 = sshll.u32 [#allocation7], 4
      %s45 = int_to_ptr.vmem [resolvable:$true] %s44
      %50 = dma.hbm_to_vmem [thread:$0]  %s3, 2048, %s45, [#allocation6], 128, 128, 8
    $region17: #{tpu_custom_call.1} parent=1 // pred_fallthru
      _
    // Predicated region
    $region18: #{tpu_custom_call.1} parent=1 // pred_check
      _
    $region19: #{tpu_custom_call.1} parent=1 // pred_check_branch
      %52 = sbr.rel (0) target = $region21
    $region20: #{tpu_custom_call.1} parent=1 // pred_region
      _
    $region21: #{tpu_custom_call.1} parent=1 // pred_fallthru
      _
    // Predicated region
    $region22: #{tpu_custom_call.1} parent=1 // pred_check
      _
    $region23: #{tpu_custom_call.1} parent=1 // pred_check_branch
      %54 = sbr.rel (0) target = $region25
    $region24: #{tpu_custom_call.1} parent=1 // pred_region
      %55 = dma.done [#allocation3], 2048
    $region25: #{tpu_custom_call.1} parent=1 // pred_fallthru
      _
    // Predicated region
    $region26: #{tpu_custom_call.1} parent=1 // pred_check
      _
    $region27: #{tpu_custom_call.1} parent=1 // pred_check_branch
      %57 = sbr.rel (0) target = $region29
    $region28: #{tpu_custom_call.1} parent=1 // pred_region
      %58 = dma.done [#allocation6], 2048
    $region29: #{tpu_custom_call.1} parent=1 // pred_fallthru
      _
    // Predicated region
    $region30: #{tpu_custom_call.1} parent=1 // pred_check
      _
    $region31: #{tpu_custom_call.1} parent=1 // pred_check_branch
      %60 = sbr.rel (0) target = $region33
    $region32: #{tpu_custom_call.1} parent=1 // pred_region
      %61 = dma.done [#allocation6], 2048
    $region33: #{tpu_custom_call.1} parent=1 // pred_fallthru
      _
    %v62 = vld [vmem:[#allocation2] sm:$0xff]
    %v63 = vld [vmem:[#allocation2 + $0x8] sm:$0xff]
    %v64 = vld [vmem:[#allocation2 + $0x10] sm:$0xff]
    %v65 = vld [vmem:[#allocation2 + $0x18] sm:$0xff]
    %v66 = vld [vmem:[#allocation2 + $0x20] sm:$0xff]
    %v67 = vld [vmem:[#allocation2 + $0x28] sm:$0xff]
    %v68 = vld [vmem:[#allocation2 + $0x30] sm:$0xff]
    %v69 = vld [vmem:[#allocation2 + $0x38] sm:$0xff]
    %v70 = vld [vmem:[#allocation2 + $0x40] sm:$0xff]
    %v71 = vld [vmem:[#allocation2 + $0x48] sm:$0xff]
    %v72 = vld [vmem:[#allocation2 + $0x50] sm:$0xff]
    %v73 = vld [vmem:[#allocation2 + $0x58] sm:$0xff]
    %v74 = vld [vmem:[#allocation2 + $0x60] sm:$0xff]
    %v75 = vld [vmem:[#allocation2 + $0x68] sm:$0xff]
    %v76 = vld [vmem:[#allocation2 + $0x70] sm:$0xff]
    %v77 = vld [vmem:[#allocation2 + $0x78] sm:$0xff]
    %v78 = vld [vmem:[#allocation5] sm:$0xff]
    %v79 = vld [vmem:[#allocation5 + $0x8] sm:$0xff]
    %v80 = vld [vmem:[#allocation5 + $0x10] sm:$0xff]
    %v81 = vld [vmem:[#allocation5 + $0x18] sm:$0xff]
    %v82 = vld [vmem:[#allocation5 + $0x20] sm:$0xff]
    %v83 = vld [vmem:[#allocation5 + $0x28] sm:$0xff]
    %v84 = vld [vmem:[#allocation5 + $0x30] sm:$0xff]
    %v85 = vld [vmem:[#allocation5 + $0x38] sm:$0xff]
    %v86 = vld [vmem:[#allocation5 + $0x40] sm:$0xff]
    %v87 = vld [vmem:[#allocation5 + $0x48] sm:$0xff]
    %v88 = vld [vmem:[#allocation5 + $0x50] sm:$0xff]
    %v89 = vld [vmem:[#allocation5 + $0x58] sm:$0xff]
    %v90 = vld [vmem:[#allocation5 + $0x60] sm:$0xff]
    %v91 = vld [vmem:[#allocation5 + $0x68] sm:$0xff]
    %v92 = vld [vmem:[#allocation5 + $0x70] sm:$0xff]
    %v93 = vld [vmem:[#allocation5 + $0x78] sm:$0xff]
    %v94 = vld [vmem:[%s2] sm:$0x1]
    %v96 = vlaneseq
    %v97 = vshrl.u32 %v96, 7
    %v98 = vsub.s32 0, %v97
    %v99 = vrot.slane %v94, %v98
    %101 = vmatprep.subr.mxu0 0.0
    %102 = vmatpush1.msra.mxu0 %v78
    %103 = vmatprep.subr.mxu0 0.0
    %104 = vmatpush1.msra.mxu0 %v79
    %105 = vmatprep.subr.mxu0 0.0
    %106 = vmatpush1.msra.mxu0 %v80
    %107 = vmatprep.subr.mxu0 0.0
    %108 = vmatpush1.msra.mxu0 %v81
    %109 = vmatprep.subr.mxu0 0.0
    %110 = vmatpush1.msra.mxu0 %v82
    %111 = vmatprep.subr.mxu0 0.0
    %112 = vmatpush1.msra.mxu0 %v83
    %113 = vmatprep.subr.mxu0 0.0
    %114 = vmatpush1.msra.mxu0 %v84
    %115 = vmatprep.subr.mxu0 0.0
    %116 = vmatpush1.msra.mxu0 %v85
    %117 = vmatprep.subr.mxu0 0.0
    %118 = vmatpush1.msra.mxu0 %v86
    %119 = vmatprep.subr.mxu0 0.0
    %120 = vmatpush1.msra.mxu0 %v87
    %121 = vmatprep.subr.mxu0 0.0
    %122 = vmatpush1.msra.mxu0 %v88
    %123 = vmatprep.subr.mxu0 0.0
    %124 = vmatpush1.msra.mxu0 %v89
    %125 = vmatprep.subr.mxu0 0.0
    %126 = vmatpush1.msra.mxu0 %v90
    %127 = vmatprep.subr.mxu0 0.0
    %128 = vmatpush1.msra.mxu0 %v91
    %129 = vmatprep.subr.mxu0 0.0
    %130 = vmatpush1.msra.mxu0 %v92
    %131 = vmatprep.subr.mxu0 0.0
    %132 = vmatpush1.msra.mxu0 %v93
    %133 = vmatprep.subr.mxu0 0.0
    %134 = vmatpush1.msra.mxu0 0.0
    %135 = vmatprep.subr.mxu0 0.0
    %136 = vmatpush1.msra.mxu0 0.0
    %137 = vmatprep.subr.mxu0 0.0
    %138 = vmatpush1.msra.mxu0 0.0
    %139 = vmatprep.subr.mxu0 0.0
    %140 = vmatpush1.msra.mxu0 0.0
    %141 = vmatprep.subr.mxu0 0.0
    %142 = vmatpush1.msra.mxu0 0.0
    %143 = vmatprep.subr.mxu0 0.0
    %144 = vmatpush1.msra.mxu0 0.0
    %145 = vmatprep.subr.mxu0 0.0
    %146 = vmatpush1.msra.mxu0 0.0
    %147 = vmatprep.subr.mxu0 0.0
    %148 = vmatpush1.msra.mxu0 0.0
    %149 = vmatprep.subr.mxu0 0.0
    %150 = vmatpush1.msra.mxu0 0.0
    %151 = vmatprep.subr.mxu0 0.0
    %152 = vmatpush1.msra.mxu0 0.0
    %153 = vmatprep.subr.mxu0 0.0
    %154 = vmatpush1.msra.mxu0 0.0
    %155 = vmatprep.subr.mxu0 0.0
    %156 = vmatpush1.msra.mxu0 0.0
    %157 = vmatprep.subr.mxu0 0.0
    %158 = vmatpush1.msra.mxu0 0.0
    %159 = vmatprep.subr.mxu0 0.0
    %160 = vmatpush1.msra.mxu0 0.0
    %161 = vmatprep.subr.mxu0 0.0
    %162 = vmatpush1.msra.mxu0 0.0
    %163 = vmatprep.subr.mxu0 0.0
    %164 = vmatpush1.msra.mxu0 0.0
    %165 = vmatprep.mubr.f32.mxu0 0.0
    %166 = vmatmul.mubr.f32.gmra.mrb[0].mxu0 %v62
    %v167 = vpop.f32.mrb[0].mxu0
    %v168 = vadd.f32 %v99, %v167
    %v169 = vpop.f32.mrb[0].mxu0
    %170 = vmatprep.mubr.f32.mxu0 0.0
    %171 = vmatmul.mubr.f32.gmra.mrb[0].mxu0 %v63
    %v172 = vpop.f32.mrb[0].mxu0
    %v173 = vadd.f32 %v99, %v172
    %v174 = vpop.f32.mrb[0].mxu0
    %175 = vmatprep.mubr.f32.mxu0 0.0
    %176 = vmatmul.mubr.f32.gmra.mrb[0].mxu0 %v64
    %v177 = vpop.f32.mrb[0].mxu0
    %v178 = vadd.f32 %v99, %v177
    %v179 = vpop.f32.mrb[0].mxu0
    %180 = vmatprep.mubr.f32.mxu0 0.0
    %181 = vmatmul.mubr.f32.gmra.mrb[0].mxu0 %v65
    %v182 = vpop.f32.mrb[0].mxu0
    %v183 = vadd.f32 %v99, %v182
    %v184 = vpop.f32.mrb[0].mxu0
    %185 = vmatprep.mubr.f32.mxu0 0.0
    %186 = vmatmul.mubr.f32.gmra.mrb[0].mxu0 %v66
    %v187 = vpop.f32.mrb[0].mxu0
    %v188 = vadd.f32 %v99, %v187
    %v189 = vpop.f32.mrb[0].mxu0
    %190 = vmatprep.mubr.f32.mxu0 0.0
    %191 = vmatmul.mubr.f32.gmra.mrb[0].mxu0 %v67
    %v192 = vpop.f32.mrb[0].mxu0
    %v193 = vadd.f32 %v99, %v192
    %v194 = vpop.f32.mrb[0].mxu0
    %195 = vmatprep.mubr.f32.mxu0 0.0
    %196 = vmatmul.mubr.f32.gmra.mrb[0].mxu0 %v68
    %v197 = vpop.f32.mrb[0].mxu0
    %v198 = vadd.f32 %v99, %v197
    %v199 = vpop.f32.mrb[0].mxu0
    %200 = vmatprep.mubr.f32.mxu0 0.0
    %201 = vmatmul.mubr.f32.gmra.mrb[0].mxu0 %v69
    %v202 = vpop.f32.mrb[0].mxu0
    %v203 = vadd.f32 %v99, %v202
    %v204 = vpop.f32.mrb[0].mxu0
    %205 = vmatprep.mubr.f32.mxu0 0.0
    %206 = vmatmul.mubr.f32.gmra.mrb[0].mxu0 %v70
    %v207 = vpop.f32.mrb[0].mxu0
    %v208 = vadd.f32 %v99, %v207
    %v209 = vpop.f32.mrb[0].mxu0
    %210 = vmatprep.mubr.f32.mxu0 0.0
    %211 = vmatmul.mubr.f32.gmra.mrb[0].mxu0 %v71
    %v212 = vpop.f32.mrb[0].mxu0
    %v213 = vadd.f32 %v99, %v212
    %v214 = vpop.f32.mrb[0].mxu0
    %215 = vmatprep.mubr.f32.mxu0 0.0
    %216 = vmatmul.mubr.f32.gmra.mrb[0].mxu0 %v72
    %v217 = vpop.f32.mrb[0].mxu0
    %v218 = vadd.f32 %v99, %v217
    %v219 = vpop.f32.mrb[0].mxu0
    %220 = vmatprep.mubr.f32.mxu0 0.0
    %221 = vmatmul.mubr.f32.gmra.mrb[0].mxu0 %v73
    %v222 = vpop.f32.mrb[0].mxu0
    %v223 = vadd.f32 %v99, %v222
    %v224 = vpop.f32.mrb[0].mxu0
    %225 = vmatprep.mubr.f32.mxu0 0.0
    %226 = vmatmul.mubr.f32.gmra.mrb[0].mxu0 %v74
    %v227 = vpop.f32.mrb[0].mxu0
    %v228 = vadd.f32 %v99, %v227
    %v229 = vpop.f32.mrb[0].mxu0
    %230 = vmatprep.mubr.f32.mxu0 0.0
    %231 = vmatmul.mubr.f32.gmra.mrb[0].mxu0 %v75
    %v232 = vpop.f32.mrb[0].mxu0
    %v233 = vadd.f32 %v99, %v232
    %v234 = vpop.f32.mrb[0].mxu0
    %235 = vmatprep.mubr.f32.mxu0 0.0
    %236 = vmatmul.mubr.f32.gmra.mrb[0].mxu0 %v76
    %v237 = vpop.f32.mrb[0].mxu0
    %v238 = vadd.f32 %v99, %v237
    %v239 = vpop.f32.mrb[0].mxu0
    %240 = vmatprep.mubr.f32.mxu0 0.0
    %241 = vmatmul.mubr.f32.gmra.mrb[0].mxu0 %v77
    %v242 = vpop.f32.mrb[0].mxu0
    %v243 = vadd.f32 %v99, %v242
    %v244 = vpop.f32.mrb[0].mxu0
    %245 = vdwg.mxu0
    %v246 = vtanh.pop %v168
    %v247 = vtanh.pop %v173
    %v248 = vtanh.pop %v178
    %v249 = vtanh.pop %v183
    %v250 = vtanh.pop %v188
    %v251 = vtanh.pop %v193
    %v252 = vtanh.pop %v198
    %v253 = vtanh.pop %v203
    %v254 = vtanh.pop %v208
    %v255 = vtanh.pop %v213
    %v256 = vtanh.pop %v218
    %v257 = vtanh.pop %v223
    %v258 = vtanh.pop %v228
    %v259 = vtanh.pop %v233
    %v260 = vtanh.pop %v238
    %v261 = vtanh.pop %v243
    %v262 = vld [vmem:[#allocation7] sm:$0xff]
    %v263 = vld [vmem:[#allocation7 + $0x8] sm:$0xff]
    %v264 = vld [vmem:[#allocation7 + $0x10] sm:$0xff]
    %v265 = vld [vmem:[#allocation7 + $0x18] sm:$0xff]
    %v266 = vld [vmem:[#allocation7 + $0x20] sm:$0xff]
    %v267 = vld [vmem:[#allocation7 + $0x28] sm:$0xff]
    %v268 = vld [vmem:[#allocation7 + $0x30] sm:$0xff]
    %v269 = vld [vmem:[#allocation7 + $0x38] sm:$0xff]
    %v270 = vld [vmem:[#allocation7 + $0x40] sm:$0xff]
    %v271 = vld [vmem:[#allocation7 + $0x48] sm:$0xff]
    %v272 = vld [vmem:[#allocation7 + $0x50] sm:$0xff]
    %v273 = vld [vmem:[#allocation7 + $0x58] sm:$0xff]
    %v274 = vld [vmem:[#allocation7 + $0x60] sm:$0xff]
    %v275 = vld [vmem:[#allocation7 + $0x68] sm:$0xff]
    %v276 = vld [vmem:[#allocation7 + $0x70] sm:$0xff]
    %v277 = vld [vmem:[#allocation7 + $0x78] sm:$0xff]
    %v278 = vld [vmem:[%s4] sm:$0x1]
    %v280 = vlaneseq
    %v281 = vshrl.u32 %v280, 7
    %v282 = vsub.s32 0, %v281
    %v283 = vrot.slane %v278, %v282
    %285 = vmatprep.subr.mxu0 0.0
    %286 = vmatpush1.msra.mxu0 %v262
    %287 = vmatprep.subr.mxu0 0.0
    %288 = vmatpush1.msra.mxu0 %v263
    %289 = vmatprep.subr.mxu0 0.0
    %290 = vmatpush1.msra.mxu0 %v264
    %291 = vmatprep.subr.mxu0 0.0
    %292 = vmatpush1.msra.mxu0 %v265
    %293 = vmatprep.subr.mxu0 0.0
    %294 = vmatpush1.msra.mxu0 %v266
    %295 = vmatprep.subr.mxu0 0.0
    %296 = vmatpush1.msra.mxu0 %v267
    %297 = vmatprep.subr.mxu0 0.0
    %298 = vmatpush1.msra.mxu0 %v268
    %299 = vmatprep.subr.mxu0 0.0
    %300 = vmatpush1.msra.mxu0 %v269
    %301 = vmatprep.subr.mxu0 0.0
    %302 = vmatpush1.msra.mxu0 %v270
    %303 = vmatprep.subr.mxu0 0.0
    %304 = vmatpush1.msra.mxu0 %v271
    %305 = vmatprep.subr.mxu0 0.0
    %306 = vmatpush1.msra.mxu0 %v272
    %307 = vmatprep.subr.mxu0 0.0
    %308 = vmatpush1.msra.mxu0 %v273
    %309 = vmatprep.subr.mxu0 0.0
    %310 = vmatpush1.msra.mxu0 %v274
    %311 = vmatprep.subr.mxu0 0.0
    %312 = vmatpush1.msra.mxu0 %v275
    %313 = vmatprep.subr.mxu0 0.0
    %314 = vmatpush1.msra.mxu0 %v276
    %315 = vmatprep.subr.mxu0 0.0
    %316 = vmatpush1.msra.mxu0 %v277
    %317 = vmatprep.subr.mxu0 0.0
    %318 = vmatpush1.msra.mxu0 0.0
    %319 = vmatprep.subr.mxu0 0.0
    %320 = vmatpush1.msra.mxu0 0.0
    %321 = vmatprep.subr.mxu0 0.0
    %322 = vmatpush1.msra.mxu0 0.0
    %323 = vmatprep.subr.mxu0 0.0
    %324 = vmatpush1.msra.mxu0 0.0
    %325 = vmatprep.subr.mxu0 0.0
    %326 = vmatpush1.msra.mxu0 0.0
    %327 = vmatprep.subr.mxu0 0.0
    %328 = vmatpush1.msra.mxu0 0.0
    %329 = vmatprep.subr.mxu0 0.0
    %330 = vmatpush1.msra.mxu0 0.0
    %331 = vmatprep.subr.mxu0 0.0
    %332 = vmatpush1.msra.mxu0 0.0
    %333 = vmatprep.subr.mxu0 0.0
    %334 = vmatpush1.msra.mxu0 0.0
    %335 = vmatprep.subr.mxu0 0.0
    %336 = vmatpush1.msra.mxu0 0.0
    %337 = vmatprep.subr.mxu0 0.0
    %338 = vmatpush1.msra.mxu0 0.0
    %339 = vmatprep.subr.mxu0 0.0
    %340 = vmatpush1.msra.mxu0 0.0
    %341 = vmatprep.subr.mxu0 0.0
    %342 = vmatpush1.msra.mxu0 0.0
    %343 = vmatprep.subr.mxu0 0.0
    %344 = vmatpush1.msra.mxu0 0.0
    %345 = vmatprep.subr.mxu0 0.0
    %346 = vmatpush1.msra.mxu0 0.0
    %347 = vmatprep.subr.mxu0 0.0
    %348 = vmatpush1.msra.mxu0 0.0
    %349 = vmatprep.mubr.f32.mxu0 0.0
    %350 = vmatmul.mubr.f32.gmra.mrb[0].mxu0 %v246
    %v351 = vpop.f32.mrb[0].mxu0
    %v352 = vadd.f32 %v283, %v351
    %v353 = vpop.f32.mrb[0].mxu0
    %354 = vmatprep.mubr.f32.mxu0 0.0
    %355 = vmatmul.mubr.f32.gmra.mrb[0].mxu0 %v247
    %v356 = vpop.f32.mrb[0].mxu0
    %v357 = vadd.f32 %v283, %v356
    %v358 = vpop.f32.mrb[0].mxu0
    %359 = vmatprep.mubr.f32.mxu0 0.0
    %360 = vmatmul.mubr.f32.gmra.mrb[0].mxu0 %v248
    %v361 = vpop.f32.mrb[0].mxu0
    %v362 = vadd.f32 %v283, %v361
    %v363 = vpop.f32.mrb[0].mxu0
    %364 = vmatprep.mubr.f32.mxu0 0.0
    %365 = vmatmul.mubr.f32.gmra.mrb[0].mxu0 %v249
    %v366 = vpop.f32.mrb[0].mxu0
    %v367 = vadd.f32 %v283, %v366
    %v368 = vpop.f32.mrb[0].mxu0
    %369 = vmatprep.mubr.f32.mxu0 0.0
    %370 = vmatmul.mubr.f32.gmra.mrb[0].mxu0 %v250
    %v371 = vpop.f32.mrb[0].mxu0
    %v372 = vadd.f32 %v283, %v371
    %v373 = vpop.f32.mrb[0].mxu0
    %374 = vmatprep.mubr.f32.mxu0 0.0
    %375 = vmatmul.mubr.f32.gmra.mrb[0].mxu0 %v251
    %v376 = vpop.f32.mrb[0].mxu0
    %v377 = vadd.f32 %v283, %v376
    %v378 = vpop.f32.mrb[0].mxu0
    %379 = vmatprep.mubr.f32.mxu0 0.0
    %380 = vmatmul.mubr.f32.gmra.mrb[0].mxu0 %v252
    %v381 = vpop.f32.mrb[0].mxu0
    %v382 = vadd.f32 %v283, %v381
    %v383 = vpop.f32.mrb[0].mxu0
    %384 = vmatprep.mubr.f32.mxu0 0.0
    %385 = vmatmul.mubr.f32.gmra.mrb[0].mxu0 %v253
    %v386 = vpop.f32.mrb[0].mxu0
    %v387 = vadd.f32 %v283, %v386
    %v388 = vpop.f32.mrb[0].mxu0
    %389 = vmatprep.mubr.f32.mxu0 0.0
    %390 = vmatmul.mubr.f32.gmra.mrb[0].mxu0 %v254
    %v391 = vpop.f32.mrb[0].mxu0
    %v392 = vadd.f32 %v283, %v391
    %v393 = vpop.f32.mrb[0].mxu0
    %394 = vmatprep.mubr.f32.mxu0 0.0
    %395 = vmatmul.mubr.f32.gmra.mrb[0].mxu0 %v255
    %v396 = vpop.f32.mrb[0].mxu0
    %v397 = vadd.f32 %v283, %v396
    %v398 = vpop.f32.mrb[0].mxu0
    %399 = vmatprep.mubr.f32.mxu0 0.0
    %400 = vmatmul.mubr.f32.gmra.mrb[0].mxu0 %v256
    %v401 = vpop.f32.mrb[0].mxu0
    %v402 = vadd.f32 %v283, %v401
    %v403 = vpop.f32.mrb[0].mxu0
    %404 = vmatprep.mubr.f32.mxu0 0.0
    %405 = vmatmul.mubr.f32.gmra.mrb[0].mxu0 %v257
    %v406 = vpop.f32.mrb[0].mxu0
    %v407 = vadd.f32 %v283, %v406
    %v408 = vpop.f32.mrb[0].mxu0
    %409 = vmatprep.mubr.f32.mxu0 0.0
    %410 = vmatmul.mubr.f32.gmra.mrb[0].mxu0 %v258
    %v411 = vpop.f32.mrb[0].mxu0
    %v412 = vadd.f32 %v283, %v411
    %v413 = vpop.f32.mrb[0].mxu0
    %414 = vmatprep.mubr.f32.mxu0 0.0
    %415 = vmatmul.mubr.f32.gmra.mrb[0].mxu0 %v259
    %v416 = vpop.f32.mrb[0].mxu0
    %v417 = vadd.f32 %v283, %v416
    %v418 = vpop.f32.mrb[0].mxu0
    %419 = vmatprep.mubr.f32.mxu0 0.0
    %420 = vmatmul.mubr.f32.gmra.mrb[0].mxu0 %v260
    %v421 = vpop.f32.mrb[0].mxu0
    %v422 = vadd.f32 %v283, %v421
    %v423 = vpop.f32.mrb[0].mxu0
    %424 = vmatprep.mubr.f32.mxu0 0.0
    %425 = vmatmul.mubr.f32.gmra.mrb[0].mxu0 %v261
    %v426 = vpop.f32.mrb[0].mxu0
    %v427 = vadd.f32 %v283, %v426
    %v428 = vpop.f32.mrb[0].mxu0
    %429 = vdwg.mxu0
    %430 = vst [vmem:[#allocation8] sm:$0xff] %v352
    %431 = vst [vmem:[#allocation8 + $0x8] sm:$0xff] %v357
    %432 = vst [vmem:[#allocation8 + $0x10] sm:$0xff] %v362
    %433 = vst [vmem:[#allocation8 + $0x18] sm:$0xff] %v367
    %434 = vst [vmem:[#allocation8 + $0x20] sm:$0xff] %v372
    %435 = vst [vmem:[#allocation8 + $0x28] sm:$0xff] %v377
    %436 = vst [vmem:[#allocation8 + $0x30] sm:$0xff] %v382
    %437 = vst [vmem:[#allocation8 + $0x38] sm:$0xff] %v387
    %438 = vst [vmem:[#allocation8 + $0x40] sm:$0xff] %v392
    %439 = vst [vmem:[#allocation8 + $0x48] sm:$0xff] %v397
    %440 = vst [vmem:[#allocation8 + $0x50] sm:$0xff] %v402
    %441 = vst [vmem:[#allocation8 + $0x58] sm:$0xff] %v407
    %442 = vst [vmem:[#allocation8 + $0x60] sm:$0xff] %v412
    %443 = vst [vmem:[#allocation8 + $0x68] sm:$0xff] %v417
    %444 = vst [vmem:[#allocation8 + $0x70] sm:$0xff] %v422
    %445 = vst [vmem:[#allocation8 + $0x78] sm:$0xff] %v427
    // Predicated region
    $region34: #{tpu_custom_call.1} parent=1 // pred_check
      _
    $region35: #{tpu_custom_call.1} parent=1 // pred_check_branch
      %447 = sbr.rel (0) target = $region37
    $region36: #{tpu_custom_call.1} parent=1 // pred_region
      %s449 = ssub.s32 2048, 2048
      %450 = vsyncadd [#allocation4], %s449
      %s451 = sshll.u32 [#allocation8], 4
      %s452 = int_to_ptr.vmem [resolvable:$true] %s451
      %457 = dma.vmem_to_hbm [thread:$0]  %s452, 2048, %s5, [#allocation4], 128, 128, 8
    $region37: #{tpu_custom_call.1} parent=1 // pred_fallthru
      _
    // Predicated region
    $region38: #{tpu_custom_call.1} parent=1 // pred_check
      _
    $region39: #{tpu_custom_call.1} parent=1 // pred_check_branch
      %459 = sbr.rel (0) target = $region41
    $region40: #{tpu_custom_call.1} parent=1 // pred_region
      %460 = dma.done [#allocation4], 2048
    $region41: #{tpu_custom_call.1} parent=1 // pred_fallthru
      _
    %461 = vsyncpa [#allocation3], 1
    %462 = vsyncpa [#allocation6], 1
    %463 = vsyncpa [#allocation4], 1

// kernel: tpu_custom_call.1
$region0: #{tpu_custom_call.1}
  #allocation0 [shape = 'u32[]', space=smem, size = 0x4, offset = 0x4, fixed_abs, tag = 'smem constant byte address 0x4 - core index']
  #allocation1 [shape = 'u32[144,128]{1,0:T(1,128)}', space=vmem, size = 0x12000, scoped, tag = 'internal scratch']
  %s0 = inlined_call_operand.hbm [shape: f32[128,128], index: 0, kind: input, shape index: {}]
  %s1 = inlined_call_operand.hbm [shape: f32[128,128], index: 1, kind: input, shape index: {}]
  %s2 = inlined_call_operand.vmem [shape: f32[1,128], index: 2, kind: input, shape index: {}]
  %s3 = inlined_call_operand.hbm [shape: f32[128,128], index: 3, kind: input, shape index: {}]
  %s4 = inlined_call_operand.vmem [shape: f32[1,128], index: 4, kind: input, shape index: {}]
  %s5 = inlined_call_operand.hbm [shape: f32[128,128], index: 5, kind: output, shape index: {}]
  %s6 = sld [smem:[#allocation0]]
  $region42: #{tpu_custom_call.1} parent=0
    _
  %s8 = ssub.s32 1, %s6
  %s9 = scalar_select 0, %s8, %s6
  $region1: #{tpu_custom_call.1} parent=0
    #allocation2 [shape = 'u8[65536]{0}', space=vmem, size = 0x10000, scoped, tag = 'input window, operand 0, single buffered']
    #allocation3 [shape = 's32[1]{0}', space=sflag, size = 0x4, scoped, tag = 'scoped memory for tpu_custom_call.1']
    #allocation4 [shape = 's32[1]{0}', space=sflag, size = 0x4, scoped, tag = 'scoped memory for tpu_custom_call.1']
    #allocation5 [shape = 'u8[65536]{0}', space=vmem, size = 0x10000, scoped, tag = 'input window, operand 1, single buffered']
    #allocation6 [shape = 's32[1]{0}', space=sflag, size = 0x4, scoped, tag = 'scoped memory for tpu_custom_call.1']
    #allocation7 [shape = 'u8[65536]{0}', space=vmem, size = 0x10000, scoped, tag = 'input window, operand 3, single buffered']
    #allocation8 [shape = 'u8[65536]{0}', space=vmem, size = 0x10000, scoped, tag = 'output window, operand 0, single buffered']
    %10 = vsyncpa [#allocation3], 0
    %11 = vsyncpa [#allocation6], 0
    %12 = vsyncpa [#allocation4], 0
    // Predicated region
    $region2: #{tpu_custom_call.1} parent=1 // pred_check
      _
    $region3: #{tpu_custom_call.1} parent=1 // pred_check_branch
      %14 = sbr.rel (0) target = $region5
    $region4: #{tpu_custom_call.1} parent=1 // pred_region
      %s16 = ssub.s32 2048, 2048
      %17 = vsyncadd [#allocation3], %s16
      %s18 = sshll.u32 [#allocation2], 4
      %s19 = int_to_ptr.vmem [resolvable:$true] %s18
      %24 = dma.hbm_to_vmem [thread:$0]  %s0, 2048, %s19, [#allocation3], 128, 128, 8
    $region5: #{tpu_custom_call.1} parent=1 // pred_fallthru
      _
    // Predicated region
    $region6: #{tpu_custom_call.1} parent=1 // pred_check
      _
    $region7: #{tpu_custom_call.1} parent=1 // pred_check_branch
      %26 = sbr.rel (0) target = $region9
    $region8: #{tpu_custom_call.1} parent=1 // pred_region
      %s28 = ssub.s32 2048, 2048
      %29 = vsyncadd [#allocation6], %s28
      %s30 = sshll.u32 [#allocation5], 4
      %s31 = int_to_ptr.vmem [resolvable:$true] %s30
      %36 = dma.hbm_to_vmem [thread:$0]  %s1, 2048, %s31, [#allocation6], 128, 128, 8
    $region9: #{tpu_custom_call.1} parent=1 // pred_fallthru
      _
    // Predicated region
    $region10: #{tpu_custom_call.1} parent=1 // pred_check
      _
    $region11: #{tpu_custom_call.1} parent=1 // pred_check_branch
      %38 = sbr.rel (0) target = $region13
    $region12: #{tpu_custom_call.1} parent=1 // pred_region
      _
    $region13: #{tpu_custom_call.1} parent=1 // pred_fallthru
      _
    // Predicated region
    $region14: #{tpu_custom_call.1} parent=1 // pred_check
      _
    $region15: #{tpu_custom_call.1} parent=1 // pred_check_branch
      %40 = sbr.rel (0) target = $region17
    $region16: #{tpu_custom_call.1} parent=1 // pred_region
      %s42 = ssub.s32 2048, 2048
      %43 = vsyncadd [#allocation6], %s42
      %s44 = sshll.u32 [#allocation7], 4
      %s45 = int_to_ptr.vmem [resolvable:$true] %s44
      %50 = dma.hbm_to_vmem [thread:$0]  %s3, 2048, %s45, [#allocation6], 128, 128, 8
    $region17: #{tpu_custom_call.1} parent=1 // pred_fallthru
      _
    // Predicated region
    $region18: #{tpu_custom_call.1} parent=1 // pred_check
      _
    $region19: #{tpu_custom_call.1} parent=1 // pred_check_branch
      %52 = sbr.rel (0) target = $region21
    $region20: #{tpu_custom_call.1} parent=1 // pred_region
      _
    $region21: #{tpu_custom_call.1} parent=1 // pred_fallthru
      _
    // Predicated region
    $region22: #{tpu_custom_call.1} parent=1 // pred_check
      _
    $region23: #{tpu_custom_call.1} parent=1 // pred_check_branch
      %54 = sbr.rel (0) target = $region25
    $region24: #{tpu_custom_call.1} parent=1 // pred_region
      %55 = dma.done [#allocation3], 2048
    $region25: #{tpu_custom_call.1} parent=1 // pred_fallthru
      _
    // Predicated region
    $region26: #{tpu_custom_call.1} parent=1 // pred_check
      _
    $region27: #{tpu_custom_call.1} parent=1 // pred_check_branch
      %57 = sbr.rel (0) target = $region29
    $region28: #{tpu_custom_call.1} parent=1 // pred_region
      %58 = dma.done [#allocation6], 2048
    $region29: #{tpu_custom_call.1} parent=1 // pred_fallthru
      _
    // Predicated region
    $region30: #{tpu_custom_call.1} parent=1 // pred_check
      _
    $region31: #{tpu_custom_call.1} parent=1 // pred_check_branch
      %60 = sbr.rel (0) target = $region33
    $region32: #{tpu_custom_call.1} parent=1 // pred_region
      %61 = dma.done [#allocation6], 2048
    $region33: #{tpu_custom_call.1} parent=1 // pred_fallthru
      _
    %v62 = vld [vmem:[#allocation2] sm:$0xff]
    %v63 = vld [vmem:[#allocation2 + $0x8] sm:$0xff]
    %v64 = vld [vmem:[#allocation2 + $0x10] sm:$0xff]
    %v65 = vld [vmem:[#allocation2 + $0x18] sm:$0xff]
    %v66 = vld [vmem:[#allocation2 + $0x20] sm:$0xff]
    %v67 = vld [vmem:[#allocation2 + $0x28] sm:$0xff]
    %v68 = vld [vmem:[#allocation2 + $0x30] sm:$0xff]
    %v69 = vld [vmem:[#allocation2 + $0x38] sm:$0xff]
    %v70 = vld [vmem:[#allocation2 + $0x40] sm:$0xff]
    %v71 = vld [vmem:[#allocation2 + $0x48] sm:$0xff]
    %v72 = vld [vmem:[#allocation2 + $0x50] sm:$0xff]
    %v73 = vld [vmem:[#allocation2 + $0x58] sm:$0xff]
    %v74 = vld [vmem:[#allocation2 + $0x60] sm:$0xff]
    %v75 = vld [vmem:[#allocation2 + $0x68] sm:$0xff]
    %v76 = vld [vmem:[#allocation2 + $0x70] sm:$0xff]
    %v77 = vld [vmem:[#allocation2 + $0x78] sm:$0xff]
    %v78 = vld [vmem:[#allocation5] sm:$0xff]
    %v79 = vld [vmem:[#allocation5 + $0x8] sm:$0xff]
    %v80 = vld [vmem:[#allocation5 + $0x10] sm:$0xff]
    %v81 = vld [vmem:[#allocation5 + $0x18] sm:$0xff]
    %v82 = vld [vmem:[#allocation5 + $0x20] sm:$0xff]
    %v83 = vld [vmem:[#allocation5 + $0x28] sm:$0xff]
    %v84 = vld [vmem:[#allocation5 + $0x30] sm:$0xff]
    %v85 = vld [vmem:[#allocation5 + $0x38] sm:$0xff]
    %v86 = vld [vmem:[#allocation5 + $0x40] sm:$0xff]
    %v87 = vld [vmem:[#allocation5 + $0x48] sm:$0xff]
    %v88 = vld [vmem:[#allocation5 + $0x50] sm:$0xff]
    %v89 = vld [vmem:[#allocation5 + $0x58] sm:$0xff]
    %v90 = vld [vmem:[#allocation5 + $0x60] sm:$0xff]
    %v91 = vld [vmem:[#allocation5 + $0x68] sm:$0xff]
    %v92 = vld [vmem:[#allocation5 + $0x70] sm:$0xff]
    %v93 = vld [vmem:[#allocation5 + $0x78] sm:$0xff]
    %v94 = vld [vmem:[%s2] sm:$0x1]
    %v96 = vlaneseq
    %v97 = vshrl.u32 %v96, 7
    %v98 = vsub.s32 0, %v97
    %v99 = vrot.slane %v94, %v98
    %101 = vmatprep.subr.mxu0 0.0
    %102 = vmatpush1.msra.mxu0 %v78
    %103 = vmatprep.subr.mxu0 0.0
    %104 = vmatpush1.msra.mxu0 %v79
    %105 = vmatprep.subr.mxu0 0.0
    %106 = vmatpush1.msra.mxu0 %v80
    %107 = vmatprep.subr.mxu0 0.0
    %108 = vmatpush1.msra.mxu0 %v81
    %109 = vmatprep.subr.mxu0 0.0
    %110 = vmatpush1.msra.mxu0 %v82
    %111 = vmatprep.subr.mxu0 0.0
    %112 = vmatpush1.msra.mxu0 %v83
    %113 = vmatprep.subr.mxu0 0.0
    %114 = vmatpush1.msra.mxu0 %v84
    %115 = vmatprep.subr.mxu0 0.0
    %116 = vmatpush1.msra.mxu0 %v85
    %117 = vmatprep.subr.mxu0 0.0
    %118 = vmatpush1.msra.mxu0 %v86
    %119 = vmatprep.subr.mxu0 0.0
    %120 = vmatpush1.msra.mxu0 %v87
    %121 = vmatprep.subr.mxu0 0.0
    %122 = vmatpush1.msra.mxu0 %v88
    %123 = vmatprep.subr.mxu0 0.0
    %124 = vmatpush1.msra.mxu0 %v89
    %125 = vmatprep.subr.mxu0 0.0
    %126 = vmatpush1.msra.mxu0 %v90
    %127 = vmatprep.subr.mxu0 0.0
    %128 = vmatpush1.msra.mxu0 %v91
    %129 = vmatprep.subr.mxu0 0.0
    %130 = vmatpush1.msra.mxu0 %v92
    %131 = vmatprep.subr.mxu0 0.0
    %132 = vmatpush1.msra.mxu0 %v93
    %133 = vmatprep.subr.mxu0 0.0
    %134 = vmatpush1.msra.mxu0 0.0
    %135 = vmatprep.subr.mxu0 0.0
    %136 = vmatpush1.msra.mxu0 0.0
    %137 = vmatprep.subr.mxu0 0.0
    %138 = vmatpush1.msra.mxu0 0.0
    %139 = vmatprep.subr.mxu0 0.0
    %140 = vmatpush1.msra.mxu0 0.0
    %141 = vmatprep.subr.mxu0 0.0
    %142 = vmatpush1.msra.mxu0 0.0
    %143 = vmatprep.subr.mxu0 0.0
    %144 = vmatpush1.msra.mxu0 0.0
    %145 = vmatprep.subr.mxu0 0.0
    %146 = vmatpush1.msra.mxu0 0.0
    %147 = vmatprep.subr.mxu0 0.0
    %148 = vmatpush1.msra.mxu0 0.0
    %149 = vmatprep.subr.mxu0 0.0
    %150 = vmatpush1.msra.mxu0 0.0
    %151 = vmatprep.subr.mxu0 0.0
    %152 = vmatpush1.msra.mxu0 0.0
    %153 = vmatprep.subr.mxu0 0.0
    %154 = vmatpush1.msra.mxu0 0.0
    %155 = vmatprep.subr.mxu0 0.0
    %156 = vmatpush1.msra.mxu0 0.0
    %157 = vmatprep.subr.mxu0 0.0
    %158 = vmatpush1.msra.mxu0 0.0
    %159 = vmatprep.subr.mxu0 0.0
    %160 = vmatpush1.msra.mxu0 0.0
    %161 = vmatprep.subr.mxu0 0.0
    %162 = vmatpush1.msra.mxu0 0.0
    %163 = vmatprep.subr.mxu0 0.0
    %164 = vmatpush1.msra.mxu0 0.0
    %165 = vmatprep.mubr.f32.mxu0 0.0
    %166 = vmatmul.mubr.f32.gmra.mrb[0].mxu0 %v62
    %v167 = vpop.f32.mrb[0].mxu0
    %v168 = vadd.f32 %v99, %v167
    %v169 = vpop.f32.mrb[0].mxu0
    %170 = vmatprep.mubr.f32.mxu0 0.0
    %171 = vmatmul.mubr.f32.gmra.mrb[0].mxu0 %v63
    %v172 = vpop.f32.mrb[0].mxu0
    %v173 = vadd.f32 %v99, %v172
    %v174 = vpop.f32.mrb[0].mxu0
    %175 = vmatprep.mubr.f32.mxu0 0.0
    %176 = vmatmul.mubr.f32.gmra.mrb[0].mxu0 %v64
    %v177 = vpop.f32.mrb[0].mxu0
    %v178 = vadd.f32 %v99, %v177
    %v179 = vpop.f32.mrb[0].mxu0
    %180 = vmatprep.mubr.f32.mxu0 0.0
    %181 = vmatmul.mubr.f32.gmra.mrb[0].mxu0 %v65
    %v182 = vpop.f32.mrb[0].mxu0
    %v183 = vadd.f32 %v99, %v182
    %v184 = vpop.f32.mrb[0].mxu0
    %185 = vmatprep.mubr.f32.mxu0 0.0
    %186 = vmatmul.mubr.f32.gmra.mrb[0].mxu0 %v66
    %v187 = vpop.f32.mrb[0].mxu0
    %v188 = vadd.f32 %v99, %v187
    %v189 = vpop.f32.mrb[0].mxu0
    %190 = vmatprep.mubr.f32.mxu0 0.0
    %191 = vmatmul.mubr.f32.gmra.mrb[0].mxu0 %v67
    %v192 = vpop.f32.mrb[0].mxu0
    %v193 = vadd.f32 %v99, %v192
    %v194 = vpop.f32.mrb[0].mxu0
    %195 = vmatprep.mubr.f32.mxu0 0.0
    %196 = vmatmul.mubr.f32.gmra.mrb[0].mxu0 %v68
    %v197 = vpop.f32.mrb[0].mxu0
    %v198 = vadd.f32 %v99, %v197
    %v199 = vpop.f32.mrb[0].mxu0
    %200 = vmatprep.mubr.f32.mxu0 0.0
    %201 = vmatmul.mubr.f32.gmra.mrb[0].mxu0 %v69
    %v202 = vpop.f32.mrb[0].mxu0
    %v203 = vadd.f32 %v99, %v202
    %v204 = vpop.f32.mrb[0].mxu0
    %205 = vmatprep.mubr.f32.mxu0 0.0
    %206 = vmatmul.mubr.f32.gmra.mrb[0].mxu0 %v70
    %v207 = vpop.f32.mrb[0].mxu0
    %v208 = vadd.f32 %v99, %v207
    %v209 = vpop.f32.mrb[0].mxu0
    %210 = vmatprep.mubr.f32.mxu0 0.0
    %211 = vmatmul.mubr.f32.gmra.mrb[0].mxu0 %v71
    %v212 = vpop.f32.mrb[0].mxu0
    %v213 = vadd.f32 %v99, %v212
    %v214 = vpop.f32.mrb[0].mxu0
    %215 = vmatprep.mubr.f32.mxu0 0.0
    %216 = vmatmul.mubr.f32.gmra.mrb[0].mxu0 %v72
    %v217 = vpop.f32.mrb[0].mxu0
    %v218 = vadd.f32 %v99, %v217
    %v219 = vpop.f32.mrb[0].mxu0
    %220 = vmatprep.mubr.f32.mxu0 0.0
    %221 = vmatmul.mubr.f32.gmra.mrb[0].mxu0 %v73
    %v222 = vpop.f32.mrb[0].mxu0
    %v223 = vadd.f32 %v99, %v222
    %v224 = vpop.f32.mrb[0].mxu0
    %225 = vmatprep.mubr.f32.mxu0 0.0
    %226 = vmatmul.mubr.f32.gmra.mrb[0].mxu0 %v74
    %v227 = vpop.f32.mrb[0].mxu0
    %v228 = vadd.f32 %v99, %v227
    %v229 = vpop.f32.mrb[0].mxu0
    %230 = vmatprep.mubr.f32.mxu0 0.0
    %231 = vmatmul.mubr.f32.gmra.mrb[0].mxu0 %v75
    %v232 = vpop.f32.mrb[0].mxu0
    %v233 = vadd.f32 %v99, %v232
    %v234 = vpop.f32.mrb[0].mxu0
    %235 = vmatprep.mubr.f32.mxu0 0.0
    %236 = vmatmul.mubr.f32.gmra.mrb[0].mxu0 %v76
    %v237 = vpop.f32.mrb[0].mxu0
    %v238 = vadd.f32 %v99, %v237
    %v239 = vpop.f32.mrb[0].mxu0
    %240 = vmatprep.mubr.f32.mxu0 0.0
    %241 = vmatmul.mubr.f32.gmra.mrb[0].mxu0 %v77
    %v242 = vpop.f32.mrb[0].mxu0
    %v243 = vadd.f32 %v99, %v242
    %v244 = vpop.f32.mrb[0].mxu0
    %245 = vdwg.mxu0
    %v246 = vtanh.pop %v168
    %v247 = vtanh.pop %v173
    %v248 = vtanh.pop %v178
    %v249 = vtanh.pop %v183
    %v250 = vtanh.pop %v188
    %v251 = vtanh.pop %v193
    %v252 = vtanh.pop %v198
    %v253 = vtanh.pop %v203
    %v254 = vtanh.pop %v208
    %v255 = vtanh.pop %v213
    %v256 = vtanh.pop %v218
    %v257 = vtanh.pop %v223
    %v258 = vtanh.pop %v228
    %v259 = vtanh.pop %v233
    %v260 = vtanh.pop %v238
    %v261 = vtanh.pop %v243
    %v262 = vld [vmem:[#allocation7] sm:$0xff]
    %v263 = vld [vmem:[#allocation7 + $0x8] sm:$0xff]
    %v264 = vld [vmem:[#allocation7 + $0x10] sm:$0xff]
    %v265 = vld [vmem:[#allocation7 + $0x18] sm:$0xff]
    %v266 = vld [vmem:[#allocation7 + $0x20] sm:$0xff]
    %v267 = vld [vmem:[#allocation7 + $0x28] sm:$0xff]
    %v268 = vld [vmem:[#allocation7 + $0x30] sm:$0xff]
    %v269 = vld [vmem:[#allocation7 + $0x38] sm:$0xff]
    %v270 = vld [vmem:[#allocation7 + $0x40] sm:$0xff]
    %v271 = vld [vmem:[#allocation7 + $0x48] sm:$0xff]
    %v272 = vld [vmem:[#allocation7 + $0x50] sm:$0xff]
    %v273 = vld [vmem:[#allocation7 + $0x58] sm:$0xff]
    %v274 = vld [vmem:[#allocation7 + $0x60] sm:$0xff]
    %v275 = vld [vmem:[#allocation7 + $0x68] sm:$0xff]
    %v276 = vld [vmem:[#allocation7 + $0x70] sm:$0xff]
    %v277 = vld [vmem:[#allocation7 + $0x78] sm:$0xff]
    %v278 = vld [vmem:[%s4] sm:$0x1]
    %v280 = vlaneseq
    %v281 = vshrl.u32 %v280, 7
    %v282 = vsub.s32 0, %v281
    %v283 = vrot.slane %v278, %v282
    %285 = vmatprep.subr.mxu0 0.0
    %286 = vmatpush1.msra.mxu0 %v262
    %287 = vmatprep.subr.mxu0 0.0
    %288 = vmatpush1.msra.mxu0 %v263
    %289 = vmatprep.subr.mxu0 0.0
    %290 = vmatpush1.msra.mxu0 %v264
    %291 = vmatprep.subr.mxu0 0.0
    %292 = vmatpush1.msra.mxu0 %v265
    %293 = vmatprep.subr.mxu0 0.0
    %294 = vmatpush1.msra.mxu0 %v266
    %295 = vmatprep.subr.mxu0 0.0
    %296 = vmatpush1.msra.mxu0 %v267
    %297 = vmatprep.subr.mxu0 0.0
    %298 = vmatpush1.msra.mxu0 %v268
    %299 = vmatprep.subr.mxu0 0.0
    %300 = vmatpush1.msra.mxu0 %v269
    %301 = vmatprep.subr.mxu0 0.0
    %302 = vmatpush1.msra.mxu0 %v270
    %303 = vmatprep.subr.mxu0 0.0
    %304 = vmatpush1.msra.mxu0 %v271
    %305 = vmatprep.subr.mxu0 0.0
    %306 = vmatpush1.msra.mxu0 %v272
    %307 = vmatprep.subr.mxu0 0.0
    %308 = vmatpush1.msra.mxu0 %v273
    %309 = vmatprep.subr.mxu0 0.0
    %310 = vmatpush1.msra.mxu0 %v274
    %311 = vmatprep.subr.mxu0 0.0
    %312 = vmatpush1.msra.mxu0 %v275
    %313 = vmatprep.subr.mxu0 0.0
    %314 = vmatpush1.msra.mxu0 %v276
    %315 = vmatprep.subr.mxu0 0.0
    %316 = vmatpush1.msra.mxu0 %v277
    %317 = vmatprep.subr.mxu0 0.0
    %318 = vmatpush1.msra.mxu0 0.0
    %319 = vmatprep.subr.mxu0 0.0
    %320 = vmatpush1.msra.mxu0 0.0
    %321 = vmatprep.subr.mxu0 0.0
    %322 = vmatpush1.msra.mxu0 0.0
    %323 = vmatprep.subr.mxu0 0.0
    %324 = vmatpush1.msra.mxu0 0.0
    %325 = vmatprep.subr.mxu0 0.0
    %326 = vmatpush1.msra.mxu0 0.0
    %327 = vmatprep.subr.mxu0 0.0
    %328 = vmatpush1.msra.mxu0 0.0
    %329 = vmatprep.subr.mxu0 0.0
    %330 = vmatpush1.msra.mxu0 0.0
    %331 = vmatprep.subr.mxu0 0.0
    %332 = vmatpush1.msra.mxu0 0.0
    %333 = vmatprep.subr.mxu0 0.0
    %334 = vmatpush1.msra.mxu0 0.0
    %335 = vmatprep.subr.mxu0 0.0
    %336 = vmatpush1.msra.mxu0 0.0
    %337 = vmatprep.subr.mxu0 0.0
    %338 = vmatpush1.msra.mxu0 0.0
    %339 = vmatprep.subr.mxu0 0.0
    %340 = vmatpush1.msra.mxu0 0.0
    %341 = vmatprep.subr.mxu0 0.0
    %342 = vmatpush1.msra.mxu0 0.0
    %343 = vmatprep.subr.mxu0 0.0
    %344 = vmatpush1.msra.mxu0 0.0
    %345 = vmatprep.subr.mxu0 0.0
    %346 = vmatpush1.msra.mxu0 0.0
    %347 = vmatprep.subr.mxu0 0.0
    %348 = vmatpush1.msra.mxu0 0.0
    %349 = vmatprep.mubr.f32.mxu0 0.0
    %350 = vmatmul.mubr.f32.gmra.mrb[0].mxu0 %v246
    %v351 = vpop.f32.mrb[0].mxu0
    %v352 = vadd.f32 %v283, %v351
    %v353 = vpop.f32.mrb[0].mxu0
    %354 = vmatprep.mubr.f32.mxu0 0.0
    %355 = vmatmul.mubr.f32.gmra.mrb[0].mxu0 %v247
    %v356 = vpop.f32.mrb[0].mxu0
    %v357 = vadd.f32 %v283, %v356
    %v358 = vpop.f32.mrb[0].mxu0
    %359 = vmatprep.mubr.f32.mxu0 0.0
    %360 = vmatmul.mubr.f32.gmra.mrb[0].mxu0 %v248
    %v361 = vpop.f32.mrb[0].mxu0
    %v362 = vadd.f32 %v283, %v361
    %v363 = vpop.f32.mrb[0].mxu0
    %364 = vmatprep.mubr.f32.mxu0 0.0
    %365 = vmatmul.mubr.f32.gmra.mrb[0].mxu0 %v249
    %v366 = vpop.f32.mrb[0].mxu0
    %v367 = vadd.f32 %v283, %v366
    %v368 = vpop.f32.mrb[0].mxu0
    %369 = vmatprep.mubr.f32.mxu0 0.0
    %370 = vmatmul.mubr.f32.gmra.mrb[0].mxu0 %v250
    %v371 = vpop.f32.mrb[0].mxu0
    %v372 = vadd.f32 %v283, %v371
    %v373 = vpop.f32.mrb[0].mxu0
    %374 = vmatprep.mubr.f32.mxu0 0.0
    %375 = vmatmul.mubr.f32.gmra.mrb[0].mxu0 %v251
    %v376 = vpop.f32.mrb[0].mxu0
    %v377 = vadd.f32 %v283, %v376
    %v378 = vpop.f32.mrb[0].mxu0
    %379 = vmatprep.mubr.f32.mxu0 0.0
    %380 = vmatmul.mubr.f32.gmra.mrb[0].mxu0 %v252
    %v381 = vpop.f32.mrb[0].mxu0
    %v382 = vadd.f32 %v283, %v381
    %v383 = vpop.f32.mrb[0].mxu0
    %384 = vmatprep.mubr.f32.mxu0 0.0
    %385 = vmatmul.mubr.f32.gmra.mrb[0].mxu0 %v253
    %v386 = vpop.f32.mrb[0].mxu0
    %v387 = vadd.f32 %v283, %v386
    %v388 = vpop.f32.mrb[0].mxu0
    %389 = vmatprep.mubr.f32.mxu0 0.0
    %390 = vmatmul.mubr.f32.gmra.mrb[0].mxu0 %v254
    %v391 = vpop.f32.mrb[0].mxu0
    %v392 = vadd.f32 %v283, %v391
    %v393 = vpop.f32.mrb[0].mxu0
    %394 = vmatprep.mubr.f32.mxu0 0.0
    %395 = vmatmul.mubr.f32.gmra.mrb[0].mxu0 %v255
    %v396 = vpop.f32.mrb[0].mxu0
    %v397 = vadd.f32 %v283, %v396
    %v398 = vpop.f32.mrb[0].mxu0
    %399 = vmatprep.mubr.f32.mxu0 0.0
    %400 = vmatmul.mubr.f32.gmra.mrb[0].mxu0 %v256
    %v401 = vpop.f32.mrb[0].mxu0
    %v402 = vadd.f32 %v283, %v401
    %v403 = vpop.f32.mrb[0].mxu0
    %404 = vmatprep.mubr.f32.mxu0 0.0
    %405 = vmatmul.mubr.f32.gmra.mrb[0].mxu0 %v257
    %v406 = vpop.f32.mrb[0].mxu0
    %v407 = vadd.f32 %v283, %v406
    %v408 = vpop.f32.mrb[0].mxu0
    %409 = vmatprep.mubr.f32.mxu0 0.0
    %410 = vmatmul.mubr.f32.gmra.mrb[0].mxu0 %v258
    %v411 = vpop.f32.mrb[0].mxu0
    %v412 = vadd.f32 %v283, %v411
    %v413 = vpop.f32.mrb[0].mxu0
    %414 = vmatprep.mubr.f32.mxu0 0.0
    %415 = vmatmul.mubr.f32.gmra.mrb[0].mxu0 %v259
    %v416 = vpop.f32.mrb[0].mxu0
    %v417 = vadd.f32 %v283, %v416
    %v418 = vpop.f32.mrb[0].mxu0
    %419 = vmatprep.mubr.f32.mxu0 0.0
    %420 = vmatmul.mubr.f32.gmra.mrb[0].mxu0 %v260
    %v421 = vpop.f32.mrb[0].mxu0
    %v422 = vadd.f32 %v283, %v421
    %v423 = vpop.f32.mrb[0].mxu0
    %424 = vmatprep.mubr.f32.mxu0 0.0
    %425 = vmatmul.mubr.f32.gmra.mrb[0].mxu0 %v261
    %v426 = vpop.f32.mrb[0].mxu0
    %v427 = vadd.f32 %v283, %v426
    %v428 = vpop.f32.mrb[0].mxu0
    %429 = vdwg.mxu0
    %430 = vst [vmem:[#allocation8] sm:$0xff] %v352
    %431 = vst [vmem:[#allocation8 + $0x8] sm:$0xff] %v357
    %432 = vst [vmem:[#allocation8 + $0x10] sm:$0xff] %v362
    %433 = vst [vmem:[#allocation8 + $0x18] sm:$0xff] %v367
    %434 = vst [vmem:[#allocation8 + $0x20] sm:$0xff] %v372
    %435 = vst [vmem:[#allocation8 + $0x28] sm:$0xff] %v377
    %436 = vst [vmem:[#allocation8 + $0x30] sm:$0xff] %v382
    %437 = vst [vmem:[#allocation8 + $0x38] sm:$0xff] %v387
    %438 = vst [vmem:[#allocation8 + $0x40] sm:$0xff] %v392
    %439 = vst [vmem:[#allocation8 + $0x48] sm:$0xff] %v397
    %440 = vst [vmem:[#allocation8 + $0x50] sm:$0xff] %v402
    %441 = vst [vmem:[#allocation8 + $0x58] sm:$0xff] %v407
    %442 = vst [vmem:[#allocation8 + $0x60] sm:$0xff] %v412
    %443 = vst [vmem:[#allocation8 + $0x68] sm:$0xff] %v417
    %444 = vst [vmem:[#allocation8 + $0x70] sm:$0xff] %v422
    %445 = vst [vmem:[#allocation8 + $0x78] sm:$0xff] %v427
    // Predicated region
    $region34: #{tpu_custom_call.1} parent=1 // pred_check
      _
    $region35: #{tpu_custom_call.1} parent=1 // pred_check_branch
      %447 = sbr.rel (0) target = $region37
    $region36: #{tpu_custom_call.1} parent=1 // pred_region
      %s449 = ssub.s32 2048, 2048
      %450 = vsyncadd [#allocation4], %s449
      %s451 = sshll.u32 [#allocation8], 4
      %s452 = int_to_ptr.vmem [resolvable:$true] %s451
      %457 = dma.vmem_to_hbm [thread:$0]  %s452, 2048, %s5, [#allocation4], 128, 128, 8
    $region37: #{tpu_custom_call.1} parent=1 // pred_fallthru
      _
    // Predicated region
    $region38: #{tpu_custom_call.1} parent=1 // pred_check
      _
    $region39: #{tpu_custom_call.1} parent=1 // pred_check_branch
      %459 = sbr.rel (0) target = $region41
    $region40: #{tpu_custom_call.1} parent=1 // pred_region
      %460 = dma.done [#allocation4], 2048
    $region41: #{tpu_custom_call.1} parent=1 // pred_fallthru
      _
    %461 = vsyncpa [#allocation3], 1
    %462 = vsyncpa [#allocation6], 1
    %463 = vsyncpa [#allocation4], 1

</llo_original>
